<compile_context>
chip_gen: v6e
topology: v6e:2x2x1
jax: 0.10.0
libtpu: 0.0.40
codegen_flags: <defaults>
</compile_context>

<pallas_src>
import functools

import jax
import jax.numpy as jnp
from jax.experimental import pallas as pl
from jax.experimental.pallas import tpu as pltpu

EPS = 1e-5
_LANE = 128
_SUBLANE = 8
_MAX_TD = 2048
_TARGET_STRIPS = 8            # >= 2x TensorCore count (v7x) for sharding/pipelining
_MIB = 1024 * 1024


def _round_up(x, m):
    return (x + m - 1) // m * m


def _sublane_multiple(dtype):
    # Native tile is 8 rows of 32-bit; packed dtypes want 16 (bf16) / 32 (int8).
    itemsize = jnp.dtype(dtype).itemsize
    return _SUBLANE * max(1, 4 // itemsize)


def _vmem_budgets():
    """Returns (per-strip tile budget, vmem_limit_bytes), per TPU generation."""
    cap = 64 * _MIB
    try:
        info = pltpu.get_tpu_info()
        cap = int(getattr(info, "vmem_capacity_bytes", cap) or cap)
    except Exception:
        pass
    if cap >= 128 * _MIB:             # v5e / v6e: 128 MiB physical VMEM
        return 80 * _MIB, 100 * _MIB
    return 28 * _MIB, 48 * _MIB       # v7x (64 MiB physical) or unknown


# --------------------- single fused pass (column strips) ---------------------

def _bn_fused_kernel(x_ref, gamma_ref, beta_ref, o_ref):
    x = x_ref[...].astype(jnp.float32)                         # (N, TD)
    inv_n = 1.0 / x.shape[0]
    # One traversal: sum and sum-of-squares (no materialized centered temp).
    mean = jnp.sum(x, axis=0, keepdims=True) * inv_n            # (1, TD)
    msq = jnp.sum(x * x, axis=0, keepdims=True) * inv_n
    var = jnp.maximum(msq - mean * mean, 0.0)
    inv_std = jax.lax.rsqrt(var + EPS)
    # Fold the affine: y = x * scale + shift  (one FMA per element on the VPU).
    scale = gamma_ref[...].astype(jnp.float32) * inv_std
    shift = beta_ref[...].astype(jnp.float32) - mean * scale
    o_ref[...] = (x * scale + shift).astype(o_ref.dtype)


# --------------------- two-pass path (large N: batch tiled) ------------------

def _bn_stats_kernel(x_ref, gamma_ref, beta_ref, scale_ref, shift_ref,
                     sum_sc, ssq_sc, *, n_true, tn):
    nt = pl.program_id(1)
    last = pl.num_programs(1) - 1

    @pl.when(nt == 0)
    def _():
        sum_sc[...] = jnp.zeros_like(sum_sc)
        ssq_sc[...] = jnp.zeros_like(ssq_sc)

    x = x_ref[...].astype(jnp.float32)                          # (TN, TD)

    def accumulate(xv):
        sum_sc[...] += jnp.sum(xv, axis=0, keepdims=True)
        ssq_sc[...] += jnp.sum(xv * xv, axis=0, keepdims=True)

    n_rem = n_true % tn       # static (Python) -> no per-tile masking overhead
    if n_rem == 0:
        accumulate(x)
    else:
        @pl.when(nt != last)
        def _():
            accumulate(x)

        @pl.when(nt == last)  # mask garbage rows only on the ragged tail tile
        def _():
            row = jax.lax.broadcasted_iota(jnp.int32, x.shape, 0)
            accumulate(jnp.where(row < n_rem, x, 0.0))

    @pl.when(nt == last)
    def _():
        inv_n = 1.0 / n_true
        mean = sum_sc[...] * inv_n
        var = jnp.maximum(ssq_sc[...] * inv_n - mean * mean, 0.0)
        inv_std = jax.lax.rsqrt(var + EPS)
        scale = gamma_ref[...].astype(jnp.float32) * inv_std
        scale_ref[...] = scale
        shift_ref[...] = beta_ref[...].astype(jnp.float32) - mean * scale


def _bn_apply_kernel(x_ref, scale_ref, shift_ref, o_ref):
    x = x_ref[...].astype(jnp.float32)
    o_ref[...] = (x * scale_ref[...] + shift_ref[...]).astype(o_ref.dtype)


# ------------------------------- wrapper -------------------------------------

def linear_batch_norm(x, gamma, beta, *, force_two_pass=False,
                      n_tile=None, d_tile=None):
    """Training-mode BatchNorm over axis 0. x: (N, dim), gamma/beta: (dim,)."""
    n, dim = x.shape
    in_bytes = jnp.dtype(x.dtype).itemsize
    vmem_budget, vmem_limit = _vmem_budgets()

    gamma2 = gamma.reshape(1, dim)
    beta2 = beta.reshape(1, dim)

    # Feature tile width: multiple of 128 (lane-dense stores) when dim allows;
    # non-multiple dims get a partial (masked) last feature block, so there is
    # no wrapper-side pad / slice (each of which is a full extra HBM pass).
    if dim <= _LANE:
        td_full = dim                      # single, possibly <128-lane block
    else:
        td_full = (dim // _LANE) * _LANE

    def strip_bytes(td_):
        # in + out blocks (double-buffered, real itemsize) + ~2 f32 temporaries
        # (f32 upcast + x*x) used by the fused kernel.
        return 2 * n * td_ * (2 * in_bytes) + 2 * n * td_ * 4

    td = min(td_full, _MAX_TD)
    if td_full > _LANE:
        # Keep >= ~_TARGET_STRIPS feature strips when dim allows it: enables
        # megacore sharding (2 TCs on v7x) and DMA/compute pipelining at a
        # negligible per-grid-step cost.
        td = min(td, max(_LANE, _round_up(pl.cdiv(dim, _TARGET_STRIPS), _LANE)))
    while td > _LANE and strip_bytes(td) > vmem_budget:
        td -= _LANE

    single_pass = (not force_two_pass) and strip_bytes(td) <= vmem_budget

    if single_pass:
        # One fused pass: grid over the feature axis only (embarrassingly
        # parallel), whole batch resident per column strip.
        num_d = pl.cdiv(dim, td)
        return pl.pallas_call(
            _bn_fused_kernel,
            out_shape=jax.ShapeDtypeStruct((n, dim), x.dtype),
            grid=(num_d,),
            in_specs=[
                pl.BlockSpec((n, td), lambda j: (0, j)),
                pl.BlockSpec((1, td), lambda j: (0, j)),
                pl.BlockSpec((1, td), lambda j: (0, j)),
            ],
            out_specs=pl.BlockSpec((n, td), lambda j: (0, j)),
            compiler_params=pltpu.CompilerParams(
                vmem_limit_bytes=vmem_limit,
                dimension_semantics=("parallel",)),
            cost_estimate=pl.CostEstimate(
                flops=6 * n * dim,
                transcendentals=dim,
                bytes_accessed=2 * n * dim * in_bytes),
        )(x, gamma2, beta2)

    # Large N: pass 1 reduces sum / sum-of-squares over batch tiles into VMEM
    # scratch and emits fused (scale, shift); pass 2 applies them tile-by-tile.
    td = d_tile if d_tile is not None else min(td_full, 512)
    tn_mult = _sublane_multiple(x.dtype)
    if n_tile is not None:
        tn = n_tile
    else:
        per_row = td * (4 * in_bytes + 2 * 4)   # dbl-buffered in/out + f32 temps
        tn = (vmem_budget // max(per_row, 1)) // tn_mult * tn_mult
        tn = max(tn_mult, tn)
        if tn >= n:
            tn = n                              # single batch tile
    num_d = pl.cdiv(dim, td)
    num_n = pl.cdiv(n, tn)

    stats_kernel = functools.partial(_bn_stats_kernel, n_true=n, tn=tn)
    scale, shift = pl.pallas_call(
        stats_kernel,
        out_shape=(jax.ShapeDtypeStruct((1, dim), jnp.float32),
                   jax.ShapeDtypeStruct((1, dim), jnp.float32)),
        grid=(num_d, num_n),
        in_specs=[
            pl.BlockSpec((tn, td), lambda j, i: (i, j)),
            pl.BlockSpec((1, td), lambda j, i: (0, j)),
            pl.BlockSpec((1, td), lambda j, i: (0, j)),
        ],
        out_specs=(pl.BlockSpec((1, td), lambda j, i: (0, j)),
                   pl.BlockSpec((1, td), lambda j, i: (0, j))),
        scratch_shapes=[pltpu.VMEM((1, td), jnp.float32),
                        pltpu.VMEM((1, td), jnp.float32)],
        compiler_params=pltpu.CompilerParams(
            vmem_limit_bytes=vmem_limit,
            dimension_semantics=("parallel", "arbitrary")),
        cost_estimate=pl.CostEstimate(
            flops=3 * n * dim, transcendentals=dim,
            bytes_accessed=n * dim * in_bytes),
    )(x, gamma2, beta2)

    return pl.pallas_call(
        _bn_apply_kernel,
        out_shape=jax.ShapeDtypeStruct((n, dim), x.dtype),
        grid=(num_d, num_n),
        in_specs=[
            pl.BlockSpec((tn, td), lambda j, i: (i, j)),
            pl.BlockSpec((1, td), lambda j, i: (0, j)),
            pl.BlockSpec((1, td), lambda j, i: (0, j)),
        ],
        out_specs=pl.BlockSpec((tn, td), lambda j, i: (i, j)),
        compiler_params=pltpu.CompilerParams(
            vmem_limit_bytes=vmem_limit,
            dimension_semantics=("parallel", "parallel")),
        cost_estimate=pl.CostEstimate(
            flops=2 * n * dim, transcendentals=0,
            bytes_accessed=2 * n * dim * in_bytes),
    )(x, scale, shift)


def _reference(x, gamma, beta):
    mean = jnp.mean(x, axis=0, keepdims=True)
    var = jnp.mean((x - mean) ** 2, axis=0, keepdims=True)
    return (x - mean) / jnp.sqrt(var + EPS) * gamma[None, :] + beta[None, :]


if __name__ == "__main__":
    key = jax.random.PRNGKey(0)
    k1, k2, k3, k4, k5, k6, k7 = jax.random.split(key, 7)

    # --- Primary check: module-sized small input (BatchNorm2d default init:
    #     weight = ones, bias = zeros). Fused single-pass path, dim < 128
    #     (full-width block, no padding needed).
    batch, dim = 8, 32
    x = jax.random.normal(k1, (batch, dim), dtype=jnp.float32)
    gamma = jnp.ones((dim,), dtype=jnp.float32)
    beta = jnp.zeros((dim,), dtype=jnp.float32)
    out = jax.block_until_ready(linear_batch_norm(x, gamma, beta))
    assert jnp.allclose(out, _reference(x, gamma, beta), atol=1e-4, rtol=1e-4), \
        "single-pass (small dim) mismatch"

    # --- Fused path with dim not a multiple of 128: exercises the partial
    #     (masked) last feature block with no wrapper-side pad / slice.
    n3, d3 = 16, 192
    x3 = jax.random.normal(k2, (n3, d3), dtype=jnp.float32)
    gamma3 = 1.0 + 0.1 * jax.random.normal(k3, (d3,), dtype=jnp.float32)
    beta3 = 0.1 * jax.random.normal(k4, (d3,), dtype=jnp.float32)
    out3 = jax.block_until_ready(linear_batch_norm(x3, gamma3, beta3))
    assert jnp.allclose(out3, _reference(x3, gamma3, beta3),
                        atol=1e-4, rtol=1e-4), "single-pass (ragged dim) mismatch"

    # --- Forced two-pass (batch-tiled reduction) path with a ragged final
    #     batch tile (only that tile is masked) and non-trivial affine.
    n2, d2 = 60, 256
    x2 = jax.random.normal(k5, (n2, d2), dtype=jnp.float32)
    gamma2 = 1.0 + 0.1 * jax.random.normal(k6, (d2,), dtype=jnp.float32)
    beta2 = 0.1 * jax.random.normal(k7, (d2,), dtype=jnp.float32)
    out2 = jax.block_until_ready(
        linear_batch_norm(x2, gamma2, beta2,
                          force_two_pass=True, n_tile=16, d_tile=128))
    assert jnp.allclose(out2, _reference(x2, gamma2, beta2),
                        atol=1e-4, rtol=1e-4), "two-pass mismatch"

    print("KERNEL_OK")
</pallas_src>

<mosaic_0001>
module attributes {stable_mosaic.version = 11 : i64} {
  func.func @_bn_fused_kernel(%arg0: i32, %arg1: memref<8x32xf32, #tpu.memory_space<vmem>>, %arg2: memref<1x32xf32, #tpu.memory_space<vmem>>, %arg3: memref<1x32xf32, #tpu.memory_space<vmem>>, %arg4: memref<8x32xf32, #tpu.memory_space<vmem>>) attributes {dimension_semantics = [#tpu.dimension_semantics<parallel>], iteration_bounds = array<i64: 1>, scalar_prefetch = 0 : i64, scratch_operands = 0 : i64, tpu.core_type = #tpu.core_type<tc>, window_params = [{transform_indices = @transform_0, window_bounds = array<i64: 8, 32>}, {transform_indices = @transform_1, window_bounds = array<i64: 1, 32>}, {transform_indices = @transform_2, window_bounds = array<i64: 1, 32>}, {transform_indices = @transform_3, window_bounds = array<i64: 8, 32>}]} {
    %c0 = arith.constant 0 : index
    %c0_0 = arith.constant 0 : index
    %0 = vector.load %arg1[%c0, %c0_0] : memref<8x32xf32, #tpu.memory_space<vmem>>, vector<8x32xf32>
    %cst = arith.constant dense<0.000000e+00> : vector<32xf32>
    %1 = vector.multi_reduction <add>, %0, %cst [0] : vector<8x32xf32> to vector<32xf32>
    %2 = vector.shape_cast %1 : vector<32xf32> to vector<1x32xf32>
    %cst_1 = arith.constant 1.250000e-01 : f32
    %3 = vector.broadcast %cst_1 : f32 to vector<1x32xf32>
    %4 = arith.mulf %2, %3 : vector<1x32xf32>
    %5 = arith.mulf %0, %0 : vector<8x32xf32>
    %cst_2 = arith.constant dense<0.000000e+00> : vector<32xf32>
    %6 = vector.multi_reduction <add>, %5, %cst_2 [0] : vector<8x32xf32> to vector<32xf32>
    %7 = vector.shape_cast %6 : vector<32xf32> to vector<1x32xf32>
    %cst_3 = arith.constant 1.250000e-01 : f32
    %8 = vector.broadcast %cst_3 : f32 to vector<1x32xf32>
    %9 = arith.mulf %7, %8 : vector<1x32xf32>
    %10 = arith.mulf %4, %4 : vector<1x32xf32>
    %11 = arith.subf %9, %10 : vector<1x32xf32>
    %cst_4 = arith.constant 0.000000e+00 : f32
    %12 = vector.broadcast %cst_4 : f32 to vector<1x32xf32>
    %13 = arith.maximumf %11, %12 : vector<1x32xf32>
    %cst_5 = arith.constant 9.99999974E-6 : f32
    %14 = vector.broadcast %cst_5 : f32 to vector<1x32xf32>
    %15 = arith.addf %13, %14 : vector<1x32xf32>
    %16 = math.rsqrt %15 : vector<1x32xf32>
    %c0_6 = arith.constant 0 : index
    %c0_7 = arith.constant 0 : index
    %17 = vector.load %arg2[%c0_6, %c0_7] : memref<1x32xf32, #tpu.memory_space<vmem>>, vector<1x32xf32>
    %18 = arith.mulf %17, %16 : vector<1x32xf32>
    %c0_8 = arith.constant 0 : index
    %c0_9 = arith.constant 0 : index
    %19 = vector.load %arg3[%c0_8, %c0_9] : memref<1x32xf32, #tpu.memory_space<vmem>>, vector<1x32xf32>
    %20 = arith.mulf %4, %18 : vector<1x32xf32>
    %21 = arith.subf %19, %20 : vector<1x32xf32>
    %22 = vector.broadcast %18 : vector<1x32xf32> to vector<8x32xf32>
    %23 = arith.mulf %0, %22 : vector<8x32xf32>
    %24 = vector.broadcast %21 : vector<1x32xf32> to vector<8x32xf32>
    %25 = arith.addf %23, %24 : vector<8x32xf32>
    %c0_10 = arith.constant 0 : index
    %c0_11 = arith.constant 0 : index
    %26 = vector.load %arg4[%c0_10, %c0_11] : memref<8x32xf32, #tpu.memory_space<vmem>>, vector<8x32xf32>
    tpu.vector_store %arg4[%c0_10, %c0_11], %25 {strides = array<i32>} : memref<8x32xf32, #tpu.memory_space<vmem>>, vector<8x32xf32>,
    return
  }
  func.func @transform_0(%arg0: i32) -> (i32, i32) {
    %c0_i32 = arith.constant 0 : i32
    %c0_i32_0 = arith.constant 0 : i32
    return %c0_i32, %arg0 : i32, i32
  }
  func.func @transform_1(%arg0: i32) -> (i32, i32) {
    %c0_i32 = arith.constant 0 : i32
    %c0_i32_0 = arith.constant 0 : i32
    return %c0_i32, %arg0 : i32, i32
  }
  func.func @transform_2(%arg0: i32) -> (i32, i32) {
    %c0_i32 = arith.constant 0 : i32
    %c0_i32_0 = arith.constant 0 : i32
    return %c0_i32, %arg0 : i32, i32
  }
  func.func @transform_3(%arg0: i32) -> (i32, i32) {
    %c0_i32 = arith.constant 0 : i32
    %c0_i32_0 = arith.constant 0 : i32
    return %c0_i32, %arg0 : i32, i32
  }
}

</mosaic_0001>

<llo_original>
// kernel: tpu_custom_call.1
$region0: #{tpu_custom_call.1}
  #allocation0 [shape = 'u32[]', space=smem, size = 0x4, offset = 0x4, fixed_abs, tag = 'smem constant byte address 0x4 - core index']
  #allocation1 [shape = 'u32[144,128]{1,0:T(1,128)}', space=vmem, size = 0x12000, scoped, tag = 'internal scratch']
  %s0 = inlined_call_operand.hbm [shape: f32[8,32], index: 0, kind: input, shape index: {}]
  %s1 = inlined_call_operand.vmem [shape: f32[1,32], index: 1, kind: input, shape index: {}]
  %s2 = inlined_call_operand.vmem [shape: f32[1,32], index: 2, kind: input, shape index: {}]
  %s3 = inlined_call_operand.hbm [shape: f32[8,32], index: 3, kind: output, shape index: {}]
  %s4 = sld [smem:[#allocation0]]
  $region26: #{tpu_custom_call.1} parent=0
    _
  %s6 = ssub.s32 1, %s4
  %s7 = scalar_select 0, %s6, %s4
  $region1: #{tpu_custom_call.1} parent=0
    #allocation2 [shape = 'u8[4096]{0}', space=vmem, size = 0x1000, scoped, tag = 'input window, operand 0, single buffered']
    #allocation3 [shape = 's32[1]{0}', space=sflag, size = 0x4, scoped, tag = 'scoped memory for tpu_custom_call.1']
    #allocation4 [shape = 's32[1]{0}', space=sflag, size = 0x4, scoped, tag = 'scoped memory for tpu_custom_call.1']
    #allocation5 [shape = 'u8[4096]{0}', space=vmem, size = 0x1000, scoped, tag = 'output window, operand 0, single buffered']
    %8 = vsyncpa [#allocation3], 0
    %9 = vsyncpa [#allocation4], 0
    // Predicated region
    $region2: #{tpu_custom_call.1} parent=1 // pred_check
      _
    $region3: #{tpu_custom_call.1} parent=1 // pred_check_branch
      %11 = sbr.rel (0) target = $region5
    $region4: #{tpu_custom_call.1} parent=1 // pred_region
      %s13 = ssub.s32 128, 128
      %14 = vsyncadd [#allocation3], %s13
      %s16 = sshll.u32 [#allocation2], 4
      %s17 = int_to_ptr.vmem [resolvable:$true] %s16
      %19 = dma.hbm_to_vmem [thread:$0]  %s0, 128, %s17, [#allocation3]
    $region5: #{tpu_custom_call.1} parent=1 // pred_fallthru
      _
    // Predicated region
    $region6: #{tpu_custom_call.1} parent=1 // pred_check
      _
    $region7: #{tpu_custom_call.1} parent=1 // pred_check_branch
      %21 = sbr.rel (0) target = $region9
    $region8: #{tpu_custom_call.1} parent=1 // pred_region
      _
    $region9: #{tpu_custom_call.1} parent=1 // pred_fallthru
      _
    // Predicated region
    $region10: #{tpu_custom_call.1} parent=1 // pred_check
      _
    $region11: #{tpu_custom_call.1} parent=1 // pred_check_branch
      %23 = sbr.rel (0) target = $region13
    $region12: #{tpu_custom_call.1} parent=1 // pred_region
      _
    $region13: #{tpu_custom_call.1} parent=1 // pred_fallthru
      _
    // Predicated region
    $region14: #{tpu_custom_call.1} parent=1 // pred_check
      _
    $region15: #{tpu_custom_call.1} parent=1 // pred_check_branch
      %25 = sbr.rel (0) target = $region17
    $region16: #{tpu_custom_call.1} parent=1 // pred_region
      %26 = dma.done [#allocation3], 128
    $region17: #{tpu_custom_call.1} parent=1 // pred_fallthru
      _
    %v27 = vld [vmem:[#allocation2] sm:$0xff]
    %vm28 = vcmask 261120
    %v29 = vsel %vm28, %v27, 0.0
    %v30 = vrot.slane %v29, 4
    %v31 = vadd.f32 %v29, %v30
    %v32 = vrot.slane %v31, 2
    %v33 = vadd.f32 %v31, %v32
    %v34 = vrot.slane %v33, 1
    %v35 = vadd.f32 %v33, %v34
    %v36 = vmul.f32 %v35, 0.125
    %v37 = vmul.f32 %v27, %v27
    %v38 = vsel %vm28, %v37, 0.0
    %v39 = vrot.slane %v38, 4
    %v40 = vadd.f32 %v38, %v39
    %v41 = vrot.slane %v40, 2
    %v42 = vadd.f32 %v40, %v41
    %v43 = vrot.slane %v42, 1
    %v44 = vadd.f32 %v42, %v43
    %v45 = vmul.f32 %v44, 0.125
    %v46 = vmul.f32 %v36, %v36
    %v47 = vsub.f32 %v45, %v46
    %v48 = vmax.f32 %v47, 0.0
    %v49 = vadd.f32 %v48, 1e-05
    %v50 = vrsqrt.pop %v49
    %v51 = vld [vmem:[%s1] sm:$0x1]
    %v52 = vmul.f32 %v51, %v50
    %v53 = vld [vmem:[%s2] sm:$0x1]
    %v54 = vmul.f32 %v36, %v52
    %v55 = vsub.f32 %v53, %v54
    %v57 = vlaneseq
    %v58 = vshrl.u32 %v57, 7
    %v59 = vsub.s32 0, %v58
    %v60 = vrot.slane %v52, %v59
    %v62 = vmul.f32 %v27, %v60
    %v64 = vlaneseq
    %v65 = vshrl.u32 %v64, 7
    %v66 = vsub.s32 0, %v65
    %v67 = vrot.slane %v55, %v66
    %v69 = vadd.f32 %v62, %v67
    %70 = vst.msk [vmem:[#allocation5] sm:$0xff] %vm28, %v69
    // Predicated region
    $region18: #{tpu_custom_call.1} parent=1 // pred_check
      _
    $region19: #{tpu_custom_call.1} parent=1 // pred_check_branch
      %72 = sbr.rel (0) target = $region21
    $region20: #{tpu_custom_call.1} parent=1 // pred_region
      %s74 = ssub.s32 128, 128
      %75 = vsyncadd [#allocation4], %s74
      %s77 = sshll.u32 [#allocation5], 4
      %s78 = int_to_ptr.vmem [resolvable:$true] %s77
      %80 = dma.vmem_to_hbm [thread:$0]  %s78, 128, %s3, [#allocation4]
    $region21: #{tpu_custom_call.1} parent=1 // pred_fallthru
      _
    // Predicated region
    $region22: #{tpu_custom_call.1} parent=1 // pred_check
      _
    $region23: #{tpu_custom_call.1} parent=1 // pred_check_branch
      %82 = sbr.rel (0) target = $region25
    $region24: #{tpu_custom_call.1} parent=1 // pred_region
      %83 = dma.done [#allocation4], 128
    $region25: #{tpu_custom_call.1} parent=1 // pred_fallthru
      _
    %84 = vsyncpa [#allocation3], 1
    %85 = vsyncpa [#allocation4], 1

</llo_original>
